<compile_context>
chip_gen: v7x
topology: tpu7x:2x2x1
jax: 0.10.0
libtpu: 0.0.40
codegen_flags: <defaults>
</compile_context>

<pallas_src>
import functools

import jax
import jax.numpy as jnp
from jax.experimental import pallas as pl
from jax.experimental.pallas import tpu as pltpu

_LANE = 128


def _partial_sq_kernel(x_ref, y_ref, o_ref, *, block_rows, rows_valid, mask_tail):
    """One grid step: (block_rows, 128) -> (1, 8, 128) partial sum of (x - y)^2."""
    d = x_ref[...].astype(jnp.float32) - y_ref[...].astype(jnp.float32)
    dd = d * d
    if mask_tail:
        # Rows past `rows_valid` belong to the ragged last block and contain
        # unspecified data; zero their contribution (cheap VPU select).
        row = (pl.program_id(0) * block_rows
               + jax.lax.broadcasted_iota(jnp.int32, dd.shape, 0))
        dd = jnp.where(row < rows_valid, dd, 0.0)
    # (block_rows, 128) -> (block_rows//8, 8, 128) does not cross any (8, 128)
    # tile boundary (free); the leading-axis sum is pure VPU vadds.
    part = dd.reshape(block_rows // 8, 8, _LANE).sum(axis=0)
    o_ref[...] = part.reshape(1, 8, _LANE)


def distill_loss(memory, mask, *, target_block_bytes=2 * 1024 * 1024):
    """memory: (N, B, C) seq-first; mask: (B, N, C) batch-first -> scalar f32 MSE."""
    N, B, C = memory.shape
    assert mask.shape == (B, N, C), "mask must be (B, N, C)"
    total = N * B * C

    # seq-first -> batch-first.  XLA fuses transpose+reshape into one copy of
    # `memory`; `mask.reshape` is free.  Input dtype (e.g. bf16) is preserved.
    x = jnp.transpose(memory, (1, 0, 2)).reshape(-1)
    y = mask.reshape(-1)

    # Lane-dense flat view: pad (zeros on *both* operands contribute 0 to the
    # squared-error sum) up to a multiple of 128 lanes and at least one full
    # (8, 128) tile.  For typical shapes (total % 128 == 0) no pad is emitted.
    padded = max(pl.cdiv(total, _LANE) * _LANE, 8 * _LANE)
    if padded != total:
        x = jnp.pad(x, (0, padded - total))
        y = jnp.pad(y, (0, padded - total))
    rows = padded // _LANE
    x = x.reshape(rows, _LANE)
    y = y.reshape(rows, _LANE)

    # Large streaming tiles: ~target_block_bytes per input block.  2 inputs x 2
    # pipeline buffers stay well under every generation's default scoped VMEM.
    itemsize = jnp.dtype(memory.dtype).itemsize
    block_rows = max(8, (target_block_bytes // itemsize // _LANE) // 8 * 8)
    block_rows = min(block_rows, pl.cdiv(rows, 8) * 8)
    num_blocks = pl.cdiv(rows, block_rows)
    mask_tail = (rows % block_rows) != 0

    partials = pl.pallas_call(
        functools.partial(
            _partial_sq_kernel,
            block_rows=block_rows,
            rows_valid=rows,
            mask_tail=mask_tail,
        ),
        out_shape=jax.ShapeDtypeStruct((num_blocks, 8, _LANE), jnp.float32),
        grid_spec=pltpu.PrefetchScalarGridSpec(
            num_scalar_prefetch=0,
            grid=(num_blocks,),
            in_specs=[
                pl.BlockSpec((block_rows, _LANE), lambda g: (g, 0)),
                pl.BlockSpec((block_rows, _LANE), lambda g: (g, 0)),
            ],
            out_specs=pl.BlockSpec((1, 8, _LANE), lambda g: (g, 0, 0)),
        ),
        compiler_params=pltpu.CompilerParams(
            # Each grid step writes its own output block -> safe to run the
            # whole grid in parallel (uses both TensorCores on v7x).
            dimension_semantics=("parallel",),
        ),
    )(x, y)

    # Final cross-block / cross-lane reduction + mean normalization outside the
    # kernel (tiny: num_blocks x 4 KiB of f32 partials).
    return jnp.sum(partials) / jnp.float32(total)


if __name__ == "__main__":
    key = jax.random.PRNGKey(0)
    k1, k2 = jax.random.split(key)

    # Small shapes consistent with the module: seq N=8, batch B=2, hidden C=32.
    N, B, C = 8, 2, 32
    memory = jax.random.normal(k1, (N, B, C), dtype=jnp.float32)
    mask = jax.random.normal(k2, (B, N, C), dtype=jnp.float32)

    loss = distill_loss(memory, mask)
    jax.block_until_ready(loss)

    # Sanity check against plain JAX.
    ref = jnp.mean((jnp.transpose(memory, (1, 0, 2)) - mask) ** 2)
    assert jnp.allclose(loss, ref, rtol=1e-5, atol=1e-6), (loss, ref)

    print("KERNEL_OK")
</pallas_src>

<mosaic_0001>
module attributes {stable_mosaic.version = 11 : i64} {
  func.func @_partial_sq_kernel(%arg0: i32, %arg1: memref<8x128xf32, #tpu.memory_space<vmem>>, %arg2: memref<8x128xf32, #tpu.memory_space<vmem>>, %arg3: memref<1x8x128xf32, #tpu.memory_space<vmem>>) attributes {dimension_semantics = [#tpu.dimension_semantics<parallel>], iteration_bounds = array<i64: 1>, scalar_prefetch = 0 : i64, scratch_operands = 0 : i64, tpu.core_type = #tpu.core_type<tc>, window_params = [{transform_indices = @transform_0, window_bounds = array<i64: 8, 128>}, {transform_indices = @transform_1, window_bounds = array<i64: 8, 128>}, {transform_indices = @transform_2, window_bounds = array<i64: 1, 8, 128>}]} {
    %c0 = arith.constant 0 : index
    %c0_0 = arith.constant 0 : index
    %0 = vector.load %arg1[%c0, %c0_0] : memref<8x128xf32, #tpu.memory_space<vmem>>, vector<8x128xf32>
    %c0_1 = arith.constant 0 : index
    %c0_2 = arith.constant 0 : index
    %1 = vector.load %arg2[%c0_1, %c0_2] : memref<8x128xf32, #tpu.memory_space<vmem>>, vector<8x128xf32>
    %2 = arith.subf %0, %1 : vector<8x128xf32>
    %3 = arith.mulf %2, %2 : vector<8x128xf32>
    %4 = vector.shape_cast %3 : vector<8x128xf32> to vector<1x8x128xf32>
    %cst = arith.constant dense<0.000000e+00> : vector<8x128xf32>
    %5 = vector.multi_reduction <add>, %4, %cst [0] : vector<1x8x128xf32> to vector<8x128xf32>
    %6 = vector.shape_cast %5 : vector<8x128xf32> to vector<1x8x128xf32>
    %c0_3 = arith.constant 0 : index
    %c0_4 = arith.constant 0 : index
    %c0_5 = arith.constant 0 : index
    %7 = vector.load %arg3[%c0_3, %c0_4, %c0_5] : memref<1x8x128xf32, #tpu.memory_space<vmem>>, vector<1x8x128xf32>
    tpu.vector_store %arg3[%c0_3, %c0_4, %c0_5], %6 {strides = array<i32>} : memref<1x8x128xf32, #tpu.memory_space<vmem>>, vector<1x8x128xf32>,
    return
  }
  func.func @transform_0(%arg0: i32) -> (i32, i32) {
    %c0_i32 = arith.constant 0 : i32
    %c0_i32_0 = arith.constant 0 : i32
    return %arg0, %c0_i32 : i32, i32
  }
  func.func @transform_1(%arg0: i32) -> (i32, i32) {
    %c0_i32 = arith.constant 0 : i32
    %c0_i32_0 = arith.constant 0 : i32
    return %arg0, %c0_i32 : i32, i32
  }
  func.func @transform_2(%arg0: i32) -> (i32, i32, i32) {
    %c0_i32 = arith.constant 0 : i32
    %c0_i32_0 = arith.constant 0 : i32
    %c0_i32_1 = arith.constant 0 : i32
    return %arg0, %c0_i32, %c0_i32_0 : i32, i32, i32
  }
}

</mosaic_0001>

<llo_original>
// kernel: tpu_custom_call.1
$region0: #{tpu_custom_call.1}
  #allocation0 [shape = 'u32[]', space=smem, size = 0x4, offset = 0x4, fixed_abs, tag = 'smem constant byte address 0x4 - core index']
  #allocation1 [shape = 'u32[144,128]{1,0:T(1,128)}', space=vmem, size = 0x12000, scoped, tag = 'internal scratch']
  %s0 = inlined_call_operand.hbm [shape: f32[8,128], index: 0, kind: input, shape index: {}]
  %s1 = inlined_call_operand.hbm [shape: f32[8,128], index: 1, kind: input, shape index: {}]
  %s2 = inlined_call_operand.hbm [shape: f32[1,8,128], index: 2, kind: output, shape index: {}]
  %s3 = sld [smem:[#allocation0]]
  $region26: #{tpu_custom_call.1} parent=0
    _
  %s5 = ssub.s32 1, %s3
  %s6 = scalar_select 0, %s5, %s3
  $region1: #{tpu_custom_call.1} parent=0
    #allocation2 [shape = 'u8[4096]{0}', space=vmem, size = 0x1000, scoped, tag = 'input window, operand 0, single buffered']
    #allocation3 [shape = 's32[1]{0}', space=sflag, size = 0x4, scoped, tag = 'scoped memory for tpu_custom_call.1']
    #allocation4 [shape = 's32[1]{0}', space=sflag, size = 0x4, scoped, tag = 'scoped memory for tpu_custom_call.1']
    #allocation5 [shape = 'u8[4096]{0}', space=vmem, size = 0x1000, scoped, tag = 'input window, operand 1, single buffered']
    #allocation6 [shape = 's32[1]{0}', space=sflag, size = 0x4, scoped, tag = 'scoped memory for tpu_custom_call.1']
    #allocation7 [shape = 'u8[4096]{0}', space=vmem, size = 0x1000, scoped, tag = 'output window, operand 0, single buffered']
    %7 = vsyncpa [#allocation3], 0
    %8 = vsyncpa [#allocation6], 0
    %9 = vsyncpa [#allocation4], 0
    // Predicated region
    $region2: #{tpu_custom_call.1} parent=1 // pred_check
      _
    $region3: #{tpu_custom_call.1} parent=1 // pred_check_branch
      %11 = sbr.rel (0) target = $region5
    $region4: #{tpu_custom_call.1} parent=1 // pred_region
      %s13 = ssub.s32 128, 128
      %14 = vsyncadd [#allocation3], %s13
      %s16 = sshll.u32 [#allocation2], 4
      %s17 = int_to_ptr.vmem [resolvable:$true] %s16
      %19 = dma.hbm_to_vmem [thread:$0]  %s0, 128, %s17, [#allocation3]
    $region5: #{tpu_custom_call.1} parent=1 // pred_fallthru
      _
    // Predicated region
    $region6: #{tpu_custom_call.1} parent=1 // pred_check
      _
    $region7: #{tpu_custom_call.1} parent=1 // pred_check_branch
      %21 = sbr.rel (0) target = $region9
    $region8: #{tpu_custom_call.1} parent=1 // pred_region
      %s23 = ssub.s32 128, 128
      %24 = vsyncadd [#allocation6], %s23
      %s26 = sshll.u32 [#allocation5], 4
      %s27 = int_to_ptr.vmem [resolvable:$true] %s26
      %29 = dma.hbm_to_vmem [thread:$0]  %s1, 128, %s27, [#allocation6]
    $region9: #{tpu_custom_call.1} parent=1 // pred_fallthru
      _
    // Predicated region
    $region10: #{tpu_custom_call.1} parent=1 // pred_check
      _
    $region11: #{tpu_custom_call.1} parent=1 // pred_check_branch
      %31 = sbr.rel (0) target = $region13
    $region12: #{tpu_custom_call.1} parent=1 // pred_region
      %32 = dma.done [#allocation3], 128
    $region13: #{tpu_custom_call.1} parent=1 // pred_fallthru
      _
    // Predicated region
    $region14: #{tpu_custom_call.1} parent=1 // pred_check
      _
    $region15: #{tpu_custom_call.1} parent=1 // pred_check_branch
      %34 = sbr.rel (0) target = $region17
    $region16: #{tpu_custom_call.1} parent=1 // pred_region
      %35 = dma.done [#allocation6], 128
    $region17: #{tpu_custom_call.1} parent=1 // pred_fallthru
      _
    %v36 = vld [vmem:[#allocation2] sm:$0xff]
    %v37 = vld [vmem:[#allocation5] sm:$0xff]
    %v38 = vsub.f32 %v36, %v37
    %v39 = vmul.f32 %v38, %v38
    %v40 = vadd.f32 %v39, 0.0
    %41 = vst [vmem:[#allocation7] sm:$0xff] %v40
    // Predicated region
    $region18: #{tpu_custom_call.1} parent=1 // pred_check
      _
    $region19: #{tpu_custom_call.1} parent=1 // pred_check_branch
      %43 = sbr.rel (0) target = $region21
    $region20: #{tpu_custom_call.1} parent=1 // pred_region
      %s45 = ssub.s32 128, 128
      %46 = vsyncadd [#allocation4], %s45
      %s48 = sshll.u32 [#allocation7], 4
      %s49 = int_to_ptr.vmem [resolvable:$true] %s48
      %51 = dma.vmem_to_hbm [thread:$0]  %s49, 128, %s2, [#allocation4]
    $region21: #{tpu_custom_call.1} parent=1 // pred_fallthru
      _
    // Predicated region
    $region22: #{tpu_custom_call.1} parent=1 // pred_check
      _
    $region23: #{tpu_custom_call.1} parent=1 // pred_check_branch
      %53 = sbr.rel (0) target = $region25
    $region24: #{tpu_custom_call.1} parent=1 // pred_region
      %54 = dma.done [#allocation4], 128
    $region25: #{tpu_custom_call.1} parent=1 // pred_fallthru
      _
    %55 = vsyncpa [#allocation3], 1
    %56 = vsyncpa [#allocation6], 1
    %57 = vsyncpa [#allocation4], 1

</llo_original>
